<compile_context>
chip_gen: v6e
topology: v6e:2x2x1
jax: 0.10.0
libtpu: 0.0.40
codegen_flags: <defaults>
</compile_context>

<pallas_src>
from functools import partial

import jax
import jax.numpy as jnp
from jax.experimental import pallas as pl
from jax.experimental.pallas import tpu as pltpu


# ----------------------------------------------------------------------------
# Fused kernel: 1x1 conv (VPU) + train-mode BatchNorm + ReLU.
# Grid = (pass, sample block, spatial block); pass is the slowest axis.
#   pass 0: h = W @ x per block, accumulate per-lane sum/sumsq partials,
#           stash h in the VMEM h-cache (if enabled), finalize scale/bias and
#           new running stats on the last block.
#   pass 1: y = relu(h * scale + bias) from the cache (or recompute conv with
#           scale folded into W when the cache is disabled).
# ----------------------------------------------------------------------------
def _fused_kernel(x_ref, w_ref, pk_ref, y_ref, ns_ref,
                  psum_ref, psumsq_ref, sb_ref, *maybe_hcache,
                  eps, momentum, count, n_tile, t_hw, chunk,
                  nb_blocks, jb_blocks, cache_h):
    hcache_ref = maybe_hcache[0] if cache_h else None
    p = pl.program_id(0)
    nb = pl.program_id(1)
    jb = pl.program_id(2)
    cout, cin = w_ref.shape

    # Static indices when there is a single block along an axis (test shape).
    n0 = 0 if nb_blocks == 1 else nb * n_tile
    if jb_blocks == 1:
        j0 = 0
    else:
        j0 = pl.multiple_of(jb * t_hw, 128)   # t_hw is a 128-multiple here

    # ---------------- pass 0: conv + batch-stat accumulation ----------------
    @pl.when(p == 0)
    def _():
        @pl.when(jnp.logical_and(nb == 0, jb == 0))
        def _():
            psum_ref[...] = jnp.zeros_like(psum_ref)
            psumsq_ref[...] = jnp.zeros_like(psumsq_ref)

        w = w_ref[...]                                    # (cout, cin)
        wcols = [w[:, ci:ci + 1] for ci in range(cin)]    # hoisted (cout,1)

        for c0 in range(0, t_hw, chunk):
            ch = min(chunk, t_hw - c0)
            xc = x_ref[:, :, pl.ds(c0, ch)]               # (n_tile, cin, ch)
            # 1x1 conv as cin broadcast multiply-adds on the VPU (K=4/N=8 is
            # far too small for the MXU and this kernel is memory-bound).
            # TODO(synk): stride-0 sublane-broadcast loads would remove the
            # per-ci XLU broadcast; kept as plain broadcasting for robustness.
            h = wcols[0] * xc[:, 0:1, :]
            for ci in range(1, cin):
                h = h + wcols[ci] * xc[:, ci:ci + 1, :]   # (n_tile, cout, ch)

            if ch % 128 == 0:
                # Per-lane partial accumulation: VPU adds only; the single
                # cross-lane XLU reduction happens once, in finalize.
                hs = jnp.sum(h, axis=0)                   # (cout, ch)
                hq = jnp.sum(h * h, axis=0)
                for g in range(ch // 128):
                    psum_ref[...] += hs[:, g * 128:(g + 1) * 128]
                    psumsq_ref[...] += hq[:, g * 128:(g + 1) * 128]
            else:
                psum_ref[:, 0:1] += jnp.sum(
                    jnp.sum(h, axis=2, keepdims=True), axis=0)
                psumsq_ref[:, 0:1] += jnp.sum(
                    jnp.sum(h * h, axis=2, keepdims=True), axis=0)

            if cache_h:
                hcache_ref[pl.ds(n0, n_tile), :, pl.ds(j0 + c0, ch)] = h

        # Finalize stats at the last stats-pass block.
        @pl.when(jnp.logical_and(nb == nb_blocks - 1, jb == jb_blocks - 1))
        def _():
            inv_count = 1.0 / count
            s = jnp.sum(psum_ref[...], axis=1, keepdims=True)     # (cout, 1)
            ss = jnp.sum(psumsq_ref[...], axis=1, keepdims=True)
            mean = s * inv_count
            # TODO(synk): E[x^2]-E[x]^2 can cancel for very large counts with
            # strongly non-zero-mean activations; a shifted/hierarchical
            # accumulation would harden this numerically.
            var = jnp.maximum(ss * inv_count - mean * mean, 0.0)
            inv_std = jax.lax.rsqrt(var + eps)
            gamma = pk_ref[:, 0:1]
            beta = pk_ref[:, 1:2]
            rmean = pk_ref[:, 2:3]
            rvar = pk_ref[:, 3:4]
            scale = gamma * inv_std
            sb_ref[:, 0:1] = scale
            sb_ref[:, 1:2] = beta - mean * scale
            # PyTorch updates running_var with the *unbiased* batch variance.
            unbiased = var * (count / (count - 1.0)) if count > 1 else var
            ns_ref[:, 0:1] = (1.0 - momentum) * rmean + momentum * mean
            ns_ref[:, 1:2] = (1.0 - momentum) * rvar + momentum * unbiased

    # ---------------- pass 1: normalize + affine + ReLU ---------------------
    @pl.when(p == 1)
    def _():
        scale = sb_ref[:, 0:1]
        bias = sb_ref[:, 1:2]
        if cache_h:
            for c0 in range(0, t_hw, chunk):
                ch = min(chunk, t_hw - c0)
                h = hcache_ref[pl.ds(n0, n_tile), :, pl.ds(j0 + c0, ch)]
                y_ref[:, :, pl.ds(c0, ch)] = jnp.maximum(
                    h * scale + bias, 0.0).astype(y_ref.dtype)
        else:
            # Recompute-conv fallback; BN scale folded into the weight so the
            # apply pass has no extra full-tile multiply.
            ws = w_ref[...] * scale                       # (cout, cin)
            wcols = [ws[:, ci:ci + 1] for ci in range(cin)]
            for c0 in range(0, t_hw, chunk):
                ch = min(chunk, t_hw - c0)
                xc = x_ref[:, :, pl.ds(c0, ch)]
                h = wcols[0] * xc[:, 0:1, :]
                for ci in range(1, cin):
                    h = h + wcols[ci] * xc[:, ci:ci + 1, :]
                y_ref[:, :, pl.ds(c0, ch)] = jnp.maximum(
                    h + bias, 0.0).astype(y_ref.dtype)


# ----------------------------------------------------------------------------
# Tiling / sizing helpers.
# ----------------------------------------------------------------------------
def _pick_hw_tile(hw, max_tile=8192):
    """Largest lane-dense (128-multiple) divisor of hw, capped; else full hw."""
    if hw <= max_tile:
        return hw
    t = (max_tile // 128) * 128
    while t >= 128:
        if hw % t == 0:
            return t
        t -= 128
    # TODO(synk): ragged HW with no 128-multiple divisor -> one full-extent
    # block (masked stores; could exceed VMEM for extreme shapes).
    return hw


def _pick_n_tile(n, per_sample_block_bytes, cap_bytes=4 << 20):
    nt = max(1, min(n, cap_bytes // max(per_sample_block_bytes, 1)))
    while n % nt:
        nt -= 1
    return nt


def _pick_chunk(t_hw, n_tile, cin, cout, vreg_budget_bytes=32 * 4096):
    """Lane sub-chunk so the per-chunk vreg working set stays well under 64."""
    if t_hw % 128 != 0:
        return t_hw
    per_lane = n_tile * (cin + 2 * cout) * 4
    ch = vreg_budget_bytes // max(per_lane, 1)
    ch = min(t_hw, max(128, (ch // 128) * 128))
    while t_hw % ch:
        ch -= 128
    return max(ch, 128)


def _vmem_capacity_bytes():
    try:
        return int(pltpu.get_tpu_info().vmem_capacity_bytes)
    except Exception:
        return 64 << 20   # conservative (v7x physical)


# ----------------------------------------------------------------------------
# Wrapper: Conv1x1 -> BN2d(train) -> ReLU, fused.
# ----------------------------------------------------------------------------
def fused_conv_bn_relu(x_nchw, w_oi, gamma, beta, running_mean, running_var,
                       *, eps, momentum):
    """Returns (y, new_running_mean, new_running_var)."""
    N, Cin, H, W = x_nchw.shape
    Cout = w_oi.shape[0]
    HW = H * W
    x3 = x_nchw.reshape(N, Cin, HW)          # NCHW -> (N, C, H*W): pure reshape
    pk = jnp.concatenate(
        [gamma.reshape(Cout, 1), beta.reshape(Cout, 1),
         running_mean.reshape(Cout, 1), running_var.reshape(Cout, 1)],
        axis=1).astype(jnp.float32)          # packed BN params (Cout, 4)

    t_hw = _pick_hw_tile(HW)
    JB = HW // t_hw
    n_tile = _pick_n_tile(N, (Cin + Cout) * t_hw * 4)
    NB = N // n_tile
    chunk = _pick_chunk(t_hw, n_tile, Cin, Cout)
    count = N * HW

    vmem_cap = _vmem_capacity_bytes()
    h_bytes = N * Cout * HW * 4
    # Cache h in VMEM (skip re-reading x / re-doing the conv in pass 1) when
    # it fits a generation-aware budget (<= 24 MiB, <= 1/4 of VMEM).
    cache_h = h_bytes <= min(vmem_cap // 4, 24 << 20)
    blk_bytes = n_tile * (Cin + Cout) * t_hw * 4
    vmem_limit = (h_bytes if cache_h else 0) + 4 * blk_bytes + (8 << 20)
    vmem_limit = int(min(max(vmem_limit, 16 << 20),
                         max(vmem_cap - (8 << 20), 16 << 20)))

    kernel = partial(_fused_kernel,
                     eps=float(eps), momentum=float(momentum),
                     count=float(count), n_tile=n_tile, t_hw=t_hw,
                     chunk=chunk, nb_blocks=NB, jb_blocks=JB, cache_h=cache_h)

    if cache_h:
        # x is only needed during pass 0: pin its block index during pass 1 so
        # it is never re-DMA'd from HBM.
        x_map = lambda p, nb, jb: (nb * (1 - p) + (NB - 1) * p, 0,
                                   jb * (1 - p) + (JB - 1) * p)
    else:
        x_map = lambda p, nb, jb: (nb, 0, jb)

    scratch = [pltpu.VMEM((Cout, 128), jnp.float32),   # per-lane sum partials
               pltpu.VMEM((Cout, 128), jnp.float32),   # per-lane sumsq partials
               pltpu.VMEM((Cout, 2), jnp.float32)]     # scale | bias
    if cache_h:
        scratch.append(pltpu.VMEM((N, Cout, HW), jnp.float32))   # h cache

    # TODO(synk): y could be emitted as bf16 to cut HBM traffic if downstream
    # tolerates it; kept f32 to match the PyTorch module exactly.
    y3, ns = pl.pallas_call(
        kernel,
        out_shape=(jax.ShapeDtypeStruct((N, Cout, HW), jnp.float32),
                   jax.ShapeDtypeStruct((Cout, 2), jnp.float32)),
        grid_spec=pltpu.PrefetchScalarGridSpec(
            num_scalar_prefetch=0,
            grid=(2, NB, JB),                 # (pass, sample blk, spatial blk)
            in_specs=[
                pl.BlockSpec((n_tile, Cin, t_hw), x_map),
                pl.BlockSpec((Cout, Cin), lambda p, nb, jb: (0, 0)),
                pl.BlockSpec((Cout, 4), lambda p, nb, jb: (0, 0)),
            ],
            out_specs=(
                # Pinned to block (0,0,0) during the stats pass; the first
                # apply step also lands on (0,0,0), so every y block reaches
                # HBM exactly once, with valid data.
                pl.BlockSpec((n_tile, Cout, t_hw),
                             lambda p, nb, jb: (nb * p, 0, jb * p)),
                pl.BlockSpec((Cout, 2), lambda p, nb, jb: (0, 0)),
            ),
            scratch_shapes=scratch),
        compiler_params=pltpu.CompilerParams(
            # Per-channel stats scratch is carried across the whole grid.
            # TODO(synk): on v7x a megacore split of the apply pass (separate
            # pallas_call with parallel dims + cross-core stats combine) would
            # use both TensorCores; not done here.
            dimension_semantics=("arbitrary", "arbitrary", "arbitrary"),
            vmem_limit_bytes=vmem_limit),
    )(x3, w_oi, pk)

    return y3.reshape(N, Cout, H, W), ns[:, 0:1], ns[:, 1:2]


# ----------------------------------------------------------------------------
# NormAdapt wrapper (parameter setup, running-stat bookkeeping, reset()).
# ----------------------------------------------------------------------------
class NormAdaptPallas:
    """Pallas port of NormAdapt wrapping Conv1x1 -> BN2d(train) -> ReLU."""

    def __init__(self, cin, cout, *, epsilon=1e-5, momentum=0.1,
                 reset_states=False, no_states=False, key=None):
        if key is None:
            key = jax.random.PRNGKey(0)
        # Conv2d(cin, cout, 1, bias=False): (cout, cin, 1, 1) -> (cout, cin)
        w4 = jax.random.normal(key, (cout, cin, 1, 1), jnp.float32) * 0.1
        self.w = w4[:, :, 0, 0]
        # BatchNorm2d(cout) params / buffers (PyTorch defaults), kept (cout,1).
        self.gamma = jnp.ones((cout, 1), jnp.float32)
        self.beta = jnp.zeros((cout, 1), jnp.float32)
        self.running_mean = jnp.zeros((cout, 1), jnp.float32)
        self.running_var = jnp.ones((cout, 1), jnp.float32)
        # model_formate(): BN forced into train mode with these hyperparams.
        self.eps = float(epsilon)
        self.momentum = float(momentum)
        if reset_states:
            self.running_mean = jnp.zeros_like(self.running_mean)
            self.running_var = jnp.ones_like(self.running_var)
        self.track_running_stats = not no_states
        if no_states:
            self.running_mean = None
            self.running_var = None
        # deepcopy(state_dict()) equivalent, for reset().
        self._saved = (self.w, self.gamma, self.beta,
                       self.running_mean, self.running_var)

    def __call__(self, x_nchw):
        cout = self.w.shape[0]
        if self.track_running_stats:
            rmean, rvar = self.running_mean, self.running_var
        else:
            rmean = jnp.zeros((cout, 1), jnp.float32)
            rvar = jnp.ones((cout, 1), jnp.float32)
        y, new_rmean, new_rvar = fused_conv_bn_relu(
            x_nchw, self.w, self.gamma, self.beta, rmean, rvar,
            eps=self.eps, momentum=self.momentum)
        if self.track_running_stats:
            # TODO(synk): under jax.jit this Python-attribute update is a host
            # side effect; thread the new stats through returns when jitting.
            self.running_mean, self.running_var = new_rmean, new_rvar
        return y

    def reset(self):
        (self.w, self.gamma, self.beta,
         self.running_mean, self.running_var) = self._saved


# ----------------------------------------------------------------------------
# Pure-jnp reference of the same Conv1x1 -> BN(train) -> ReLU forward.
# ----------------------------------------------------------------------------
def _reference(x_nchw, w, gamma, beta, rmean, rvar, *, eps, momentum):
    N, Cin, H, W = x_nchw.shape
    Cout = w.shape[0]
    h = jnp.einsum('oc,nchw->nohw', w, x_nchw)                    # 1x1 conv
    hm = h.reshape(N, Cout, H * W)
    mean = jnp.mean(hm, axis=(0, 2), keepdims=True)
    var = jnp.mean((hm - mean) ** 2, axis=(0, 2), keepdims=True)
    y = (hm - mean) * jax.lax.rsqrt(var + eps)
    y = y * gamma.reshape(1, Cout, 1) + beta.reshape(1, Cout, 1)
    y = jnp.maximum(y, 0.0).reshape(N, Cout, H, W)
    m = N * H * W
    unbiased = var * (m / (m - 1)) if m > 1 else var
    new_rm = (1.0 - momentum) * rmean + momentum * mean.reshape(Cout, 1)
    new_rv = (1.0 - momentum) * rvar + momentum * unbiased.reshape(Cout, 1)
    return y, new_rm, new_rv


if __name__ == "__main__":
    key = jax.random.PRNGKey(0)
    kx, kw = jax.random.split(key)
    x = jax.random.normal(kx, (2, 4, 16, 16), jnp.float32)        # NCHW

    model = NormAdaptPallas(cin=4, cout=8, epsilon=1e-5, momentum=0.1, key=kw)
    rm0, rv0 = model.running_mean, model.running_var

    y = jax.block_until_ready(model(x))

    ref_y, ref_rm, ref_rv = _reference(
        x, model.w, model.gamma, model.beta, rm0, rv0,
        eps=model.eps, momentum=model.momentum)

    assert y.shape == (2, 8, 16, 16)
    assert jnp.allclose(y, ref_y, atol=1e-4, rtol=1e-4)
    assert jnp.allclose(model.running_mean, ref_rm, atol=1e-4, rtol=1e-4)
    assert jnp.allclose(model.running_var, ref_rv, atol=1e-4, rtol=1e-4)
    print("KERNEL_OK")
</pallas_src>

<mosaic_0001>
module attributes {stable_mosaic.version = 11 : i64} {
  func.func @_fused_kernel(%arg0: i32, %arg1: i32, %arg2: i32, %arg3: memref<2x4x256xf32, #tpu.memory_space<vmem>>, %arg4: memref<8x4xf32, #tpu.memory_space<vmem>>, %arg5: memref<8x4xf32, #tpu.memory_space<vmem>>, %arg6: memref<2x8x256xf32, #tpu.memory_space<vmem>>, %arg7: memref<8x2xf32, #tpu.memory_space<vmem>>, %arg8: memref<8x128xf32, #tpu.memory_space<vmem>>, %arg9: memref<8x128xf32, #tpu.memory_space<vmem>>, %arg10: memref<8x2xf32, #tpu.memory_space<vmem>>, %arg11: memref<2x8x256xf32, #tpu.memory_space<vmem>>) attributes {dimension_semantics = [#tpu.dimension_semantics<arbitrary>, #tpu.dimension_semantics<arbitrary>, #tpu.dimension_semantics<arbitrary>], iteration_bounds = array<i64: 2, 1, 1>, scalar_prefetch = 0 : i64, scratch_operands = 4 : i64, tpu.core_type = #tpu.core_type<tc>, window_params = [{transform_indices = @transform_0, window_bounds = array<i64: 2, 4, 256>}, {pipeline_mode = #tpu.pipeline_mode<synchronous>, transform_indices = @transform_1, window_bounds = array<i64: 8, 4>}, {pipeline_mode = #tpu.pipeline_mode<synchronous>, transform_indices = @transform_2, window_bounds = array<i64: 8, 4>}, {transform_indices = @transform_3, window_bounds = array<i64: 2, 8, 256>}, {pipeline_mode = #tpu.pipeline_mode<synchronous>, transform_indices = @transform_4, window_bounds = array<i64: 8, 2>}]} {
    %c0_i32 = arith.constant 0 : i32
    %0 = arith.cmpi eq, %arg0, %c0_i32 : i32
    %1 = arith.extui %0 : i1 to i32
    %c0_i32_0 = arith.constant 0 : i32
    %2 = arith.cmpi ne, %1, %c0_i32_0 : i32
    scf.if %2 {
      %c0_i32_2 = arith.constant 0 : i32
      %6 = arith.cmpi eq, %arg1, %c0_i32_2 : i32
      %c0_i32_3 = arith.constant 0 : i32
      %7 = arith.cmpi eq, %arg2, %c0_i32_3 : i32
      %8 = arith.andi %6, %7 : i1
      %9 = arith.extui %8 : i1 to i32
      %c0_i32_4 = arith.constant 0 : i32
      %10 = arith.cmpi ne, %9, %c0_i32_4 : i32
      scf.if %10 {
        %cst_32 = arith.constant 0.000000e+00 : f32
        %65 = vector.broadcast %cst_32 : f32 to vector<8x128xf32>
        %c0_33 = arith.constant 0 : index
        %c0_34 = arith.constant 0 : index
        %66 = vector.load %arg8[%c0_33, %c0_34] : memref<8x128xf32, #tpu.memory_space<vmem>>, vector<8x128xf32>
        tpu.vector_store %arg8[%c0_33, %c0_34], %65 {strides = array<i32>} : memref<8x128xf32, #tpu.memory_space<vmem>>, vector<8x128xf32>,
        %cst_35 = arith.constant 0.000000e+00 : f32
        %67 = vector.broadcast %cst_35 : f32 to vector<8x128xf32>
        %c0_36 = arith.constant 0 : index
        %c0_37 = arith.constant 0 : index
        %68 = vector.load %arg9[%c0_36, %c0_37] : memref<8x128xf32, #tpu.memory_space<vmem>>, vector<8x128xf32>
        tpu.vector_store %arg9[%c0_36, %c0_37], %67 {strides = array<i32>} : memref<8x128xf32, #tpu.memory_space<vmem>>, vector<8x128xf32>,
      } else {
      }
      %c0 = arith.constant 0 : index
      %c0_5 = arith.constant 0 : index
      %11 = vector.load %arg4[%c0, %c0_5] : memref<8x4xf32, #tpu.memory_space<vmem>>, vector<8x4xf32>
      %12 = vector.extract_strided_slice %11 {offsets = [0, 0], sizes = [8, 1], strides = [1, 1]} : vector<8x4xf32> to vector<8x1xf32>
      %13 = vector.extract_strided_slice %11 {offsets = [0, 1], sizes = [8, 1], strides = [1, 1]} : vector<8x4xf32> to vector<8x1xf32>
      %14 = vector.extract_strided_slice %11 {offsets = [0, 2], sizes = [8, 1], strides = [1, 1]} : vector<8x4xf32> to vector<8x1xf32>
      %15 = vector.extract_strided_slice %11 {offsets = [0, 3], sizes = [8, 1], strides = [1, 1]} : vector<8x4xf32> to vector<8x1xf32>
      %c0_6 = arith.constant 0 : index
      %c0_7 = arith.constant 0 : index
      %c0_8 = arith.constant 0 : index
      %16 = vector.load %arg3[%c0_6, %c0_7, %c0_8] : memref<2x4x256xf32, #tpu.memory_space<vmem>>, vector<2x4x256xf32>
      %17 = vector.extract_strided_slice %16 {offsets = [0, 0, 0], sizes = [2, 1, 256], strides = [1, 1, 1]} : vector<2x4x256xf32> to vector<2x1x256xf32>
      %18 = vector.shape_cast %12 : vector<8x1xf32> to vector<1x8x1xf32>
      %19 = vector.broadcast %18 : vector<1x8x1xf32> to vector<2x8x256xf32>
      %20 = vector.broadcast %17 : vector<2x1x256xf32> to vector<2x8x256xf32>
      %21 = arith.mulf %19, %20 : vector<2x8x256xf32>
      %22 = vector.extract_strided_slice %16 {offsets = [0, 1, 0], sizes = [2, 1, 256], strides = [1, 1, 1]} : vector<2x4x256xf32> to vector<2x1x256xf32>
      %23 = vector.shape_cast %13 : vector<8x1xf32> to vector<1x8x1xf32>
      %24 = vector.broadcast %23 : vector<1x8x1xf32> to vector<2x8x256xf32>
      %25 = vector.broadcast %22 : vector<2x1x256xf32> to vector<2x8x256xf32>
      %26 = arith.mulf %24, %25 : vector<2x8x256xf32>
      %27 = arith.addf %21, %26 : vector<2x8x256xf32>
      %28 = vector.extract_strided_slice %16 {offsets = [0, 2, 0], sizes = [2, 1, 256], strides = [1, 1, 1]} : vector<2x4x256xf32> to vector<2x1x256xf32>
      %29 = vector.shape_cast %14 : vector<8x1xf32> to vector<1x8x1xf32>
      %30 = vector.broadcast %29 : vector<1x8x1xf32> to vector<2x8x256xf32>
      %31 = vector.broadcast %28 : vector<2x1x256xf32> to vector<2x8x256xf32>
      %32 = arith.mulf %30, %31 : vector<2x8x256xf32>
      %33 = arith.addf %27, %32 : vector<2x8x256xf32>
      %34 = vector.extract_strided_slice %16 {offsets = [0, 3, 0], sizes = [2, 1, 256], strides = [1, 1, 1]} : vector<2x4x256xf32> to vector<2x1x256xf32>
      %35 = vector.shape_cast %15 : vector<8x1xf32> to vector<1x8x1xf32>
      %36 = vector.broadcast %35 : vector<1x8x1xf32> to vector<2x8x256xf32>
      %37 = vector.broadcast %34 : vector<2x1x256xf32> to vector<2x8x256xf32>
      %38 = arith.mulf %36, %37 : vector<2x8x256xf32>
      %39 = arith.addf %33, %38 : vector<2x8x256xf32>
      %cst = arith.constant dense<0.000000e+00> : vector<8x256xf32>
      %40 = vector.multi_reduction <add>, %39, %cst [0] : vector<2x8x256xf32> to vector<8x256xf32>
      %41 = arith.mulf %39, %39 : vector<2x8x256xf32>
      %cst_9 = arith.constant dense<0.000000e+00> : vector<8x256xf32>
      %42 = vector.multi_reduction <add>, %41, %cst_9 [0] : vector<2x8x256xf32> to vector<8x256xf32>
      %c0_10 = arith.constant 0 : index
      %c0_11 = arith.constant 0 : index
      %43 = vector.load %arg8[%c0_10, %c0_11] : memref<8x128xf32, #tpu.memory_space<vmem>>, vector<8x128xf32>
      %44 = vector.extract_strided_slice %40 {offsets = [0, 0], sizes = [8, 128], strides = [1, 1]} : vector<8x256xf32> to vector<8x128xf32>
      %45 = arith.addf %43, %44 : vector<8x128xf32>
      %c0_12 = arith.constant 0 : index
      %c0_13 = arith.constant 0 : index
      %46 = vector.load %arg8[%c0_12, %c0_13] : memref<8x128xf32, #tpu.memory_space<vmem>>, vector<8x128xf32>
      tpu.vector_store %arg8[%c0_12, %c0_13], %45 {strides = array<i32>} : memref<8x128xf32, #tpu.memory_space<vmem>>, vector<8x128xf32>,
      %c0_14 = arith.constant 0 : index
      %c0_15 = arith.constant 0 : index
      %47 = vector.load %arg9[%c0_14, %c0_15] : memref<8x128xf32, #tpu.memory_space<vmem>>, vector<8x128xf32>
      %48 = vector.extract_strided_slice %42 {offsets = [0, 0], sizes = [8, 128], strides = [1, 1]} : vector<8x256xf32> to vector<8x128xf32>
      %49 = arith.addf %47, %48 : vector<8x128xf32>
      %c0_16 = arith.constant 0 : index
      %c0_17 = arith.constant 0 : index
      %50 = vector.load %arg9[%c0_16, %c0_17] : memref<8x128xf32, #tpu.memory_space<vmem>>, vector<8x128xf32>
      tpu.vector_store %arg9[%c0_16, %c0_17], %49 {strides = array<i32>} : memref<8x128xf32, #tpu.memory_space<vmem>>, vector<8x128xf32>,
      %c0_18 = arith.constant 0 : index
      %c0_19 = arith.constant 0 : index
      %51 = vector.load %arg8[%c0_18, %c0_19] : memref<8x128xf32, #tpu.memory_space<vmem>>, vector<8x128xf32>
      %52 = vector.extract_strided_slice %40 {offsets = [0, 128], sizes = [8, 128], strides = [1, 1]} : vector<8x256xf32> to vector<8x128xf32>
      %53 = arith.addf %51, %52 : vector<8x128xf32>
      %c0_20 = arith.constant 0 : index
      %c0_21 = arith.constant 0 : index
      %54 = vector.load %arg8[%c0_20, %c0_21] : memref<8x128xf32, #tpu.memory_space<vmem>>, vector<8x128xf32>
      tpu.vector_store %arg8[%c0_20, %c0_21], %53 {strides = array<i32>} : memref<8x128xf32, #tpu.memory_space<vmem>>, vector<8x128xf32>,
      %c0_22 = arith.constant 0 : index
      %c0_23 = arith.constant 0 : index
      %55 = vector.load %arg9[%c0_22, %c0_23] : memref<8x128xf32, #tpu.memory_space<vmem>>, vector<8x128xf32>
      %56 = vector.extract_strided_slice %42 {offsets = [0, 128], sizes = [8, 128], strides = [1, 1]} : vector<8x256xf32> to vector<8x128xf32>
      %57 = arith.addf %55, %56 : vector<8x128xf32>
      %c0_24 = arith.constant 0 : index
      %c0_25 = arith.constant 0 : index
      %58 = vector.load %arg9[%c0_24, %c0_25] : memref<8x128xf32, #tpu.memory_space<vmem>>, vector<8x128xf32>
      tpu.vector_store %arg9[%c0_24, %c0_25], %57 {strides = array<i32>} : memref<8x128xf32, #tpu.memory_space<vmem>>, vector<8x128xf32>,
      %c0_26 = arith.constant 0 : index
      %c0_27 = arith.constant 0 : index
      %c0_28 = arith.constant 0 : index
      %59 = vector.load %arg11[%c0_26, %c0_27, %c0_28] : memref<2x8x256xf32, #tpu.memory_space<vmem>>, vector<2x8x256xf32>
      tpu.vector_store %arg11[%c0_26, %c0_27, %c0_28], %39 {strides = array<i32>} : memref<2x8x256xf32, #tpu.memory_space<vmem>>, vector<2x8x256xf32>,
      %c0_i32_29 = arith.constant 0 : i32
      %60 = arith.cmpi eq, %arg1, %c0_i32_29 : i32
      %c0_i32_30 = arith.constant 0 : i32
      %61 = arith.cmpi eq, %arg2, %c0_i32_30 : i32
      %62 = arith.andi %60, %61 : i1
      %63 = arith.extui %62 : i1 to i32
      %c0_i32_31 = arith.constant 0 : i32
      %64 = arith.cmpi ne, %63, %c0_i32_31 : i32
      scf.if %64 {
        %c0_32 = arith.constant 0 : index
        %c0_33 = arith.constant 0 : index
        %65 = vector.load %arg8[%c0_32, %c0_33] : memref<8x128xf32, #tpu.memory_space<vmem>>, vector<8x128xf32>
        %cst_34 = arith.constant dense<0.000000e+00> : vector<8xf32>
        %66 = vector.multi_reduction <add>, %65, %cst_34 [1] : vector<8x128xf32> to vector<8xf32>
        %67 = vector.shape_cast %66 : vector<8xf32> to vector<8x1xf32>
        %c0_35 = arith.constant 0 : index
        %c0_36 = arith.constant 0 : index
        %68 = vector.load %arg9[%c0_35, %c0_36] : memref<8x128xf32, #tpu.memory_space<vmem>>, vector<8x128xf32>
        %cst_37 = arith.constant dense<0.000000e+00> : vector<8xf32>
        %69 = vector.multi_reduction <add>, %68, %cst_37 [1] : vector<8x128xf32> to vector<8xf32>
        %70 = vector.shape_cast %69 : vector<8xf32> to vector<8x1xf32>
        %cst_38 = arith.constant 0.001953125 : f32
        %71 = vector.broadcast %cst_38 : f32 to vector<8x1xf32>
        %72 = arith.mulf %67, %71 : vector<8x1xf32>
        %cst_39 = arith.constant 0.001953125 : f32
        %73 = vector.broadcast %cst_39 : f32 to vector<8x1xf32>
        %74 = arith.mulf %70, %73 : vector<8x1xf32>
        %75 = arith.mulf %72, %72 : vector<8x1xf32>
        %76 = arith.subf %74, %75 : vector<8x1xf32>
        %cst_40 = arith.constant 0.000000e+00 : f32
        %77 = vector.broadcast %cst_40 : f32 to vector<8x1xf32>
        %78 = arith.maximumf %76, %77 : vector<8x1xf32>
        %cst_41 = arith.constant 9.99999974E-6 : f32
        %79 = vector.broadcast %cst_41 : f32 to vector<8x1xf32>
        %80 = arith.addf %78, %79 : vector<8x1xf32>
        %81 = math.rsqrt %80 : vector<8x1xf32>
        %c0_42 = arith.constant 0 : index
        %c0_43 = arith.constant 0 : index
        %82 = vector.load %arg5[%c0_42, %c0_43] : memref<8x4xf32, #tpu.memory_space<vmem>>, vector<8x1xf32>
        %c0_44 = arith.constant 0 : index
        %c1 = arith.constant 1 : index
        %83 = vector.load %arg5[%c0_44, %c1] : memref<8x4xf32, #tpu.memory_space<vmem>>, vector<8x1xf32>
        %c0_45 = arith.constant 0 : index
        %c2 = arith.constant 2 : index
        %84 = vector.load %arg5[%c0_45, %c2] : memref<8x4xf32, #tpu.memory_space<vmem>>, vector<8x1xf32>
        %c0_46 = arith.constant 0 : index
        %c3 = arith.constant 3 : index
        %85 = vector.load %arg5[%c0_46, %c3] : memref<8x4xf32, #tpu.memory_space<vmem>>, vector<8x1xf32>
        %86 = arith.mulf %82, %81 : vector<8x1xf32>
        %c0_47 = arith.constant 0 : index
        %c0_48 = arith.constant 0 : index
        %87 = vector.load %arg10[%c0_47, %c0_48] : memref<8x2xf32, #tpu.memory_space<vmem>>, vector<8x1xf32>
        tpu.vector_store %arg10[%c0_47, %c0_48], %86 {strides = array<i32>} : memref<8x2xf32, #tpu.memory_space<vmem>>, vector<8x1xf32>,
        %88 = arith.mulf %72, %86 : vector<8x1xf32>
        %89 = arith.subf %83, %88 : vector<8x1xf32>
        %c0_49 = arith.constant 0 : index
        %c1_50 = arith.constant 1 : index
        %90 = vector.load %arg10[%c0_49, %c1_50] : memref<8x2xf32, #tpu.memory_space<vmem>>, vector<8x1xf32>
        tpu.vector_store %arg10[%c0_49, %c1_50], %89 {strides = array<i32>} : memref<8x2xf32, #tpu.memory_space<vmem>>, vector<8x1xf32>,
        %cst_51 = arith.constant 1.00195694 : f32
        %91 = vector.broadcast %cst_51 : f32 to vector<8x1xf32>
        %92 = arith.mulf %78, %91 : vector<8x1xf32>
        %cst_52 = arith.constant 0.899999976 : f32
        %93 = vector.broadcast %cst_52 : f32 to vector<8x1xf32>
        %94 = arith.mulf %93, %84 : vector<8x1xf32>
        %cst_53 = arith.constant 1.000000e-01 : f32
        %95 = vector.broadcast %cst_53 : f32 to vector<8x1xf32>
        %96 = arith.mulf %95, %72 : vector<8x1xf32>
        %97 = arith.addf %94, %96 : vector<8x1xf32>
        %c0_54 = arith.constant 0 : index
        %c0_55 = arith.constant 0 : index
        %98 = vector.load %arg7[%c0_54, %c0_55] : memref<8x2xf32, #tpu.memory_space<vmem>>, vector<8x1xf32>
        tpu.vector_store %arg7[%c0_54, %c0_55], %97 {strides = array<i32>} : memref<8x2xf32, #tpu.memory_space<vmem>>, vector<8x1xf32>,
        %cst_56 = arith.constant 0.899999976 : f32
        %99 = vector.broadcast %cst_56 : f32 to vector<8x1xf32>
        %100 = arith.mulf %99, %85 : vector<8x1xf32>
        %cst_57 = arith.constant 1.000000e-01 : f32
        %101 = vector.broadcast %cst_57 : f32 to vector<8x1xf32>
        %102 = arith.mulf %101, %92 : vector<8x1xf32>
        %103 = arith.addf %100, %102 : vector<8x1xf32>
        %c0_58 = arith.constant 0 : index
        %c1_59 = arith.constant 1 : index
        %104 = vector.load %arg7[%c0_58, %c1_59] : memref<8x2xf32, #tpu.memory_space<vmem>>, vector<8x1xf32>
        tpu.vector_store %arg7[%c0_58, %c1_59], %103 {strides = array<i32>} : memref<8x2xf32, #tpu.memory_space<vmem>>, vector<8x1xf32>,
      } else {
      }
    } else {
    }
    %c1_i32 = arith.constant 1 : i32
    %3 = arith.cmpi eq, %arg0, %c1_i32 : i32
    %4 = arith.extui %3 : i1 to i32
    %c0_i32_1 = arith.constant 0 : i32
    %5 = arith.cmpi ne, %4, %c0_i32_1 : i32
    scf.if %5 {
      %c0 = arith.constant 0 : index
      %c0_2 = arith.constant 0 : index
      %6 = vector.load %arg10[%c0, %c0_2] : memref<8x2xf32, #tpu.memory_space<vmem>>, vector<8x1xf32>
      %c0_3 = arith.constant 0 : index
      %c1 = arith.constant 1 : index
      %7 = vector.load %arg10[%c0_3, %c1] : memref<8x2xf32, #tpu.memory_space<vmem>>, vector<8x1xf32>
      %c0_4 = arith.constant 0 : index
      %c0_5 = arith.constant 0 : index
      %c0_6 = arith.constant 0 : index
      %8 = vector.load %arg11[%c0_4, %c0_5, %c0_6] : memref<2x8x256xf32, #tpu.memory_space<vmem>>, vector<2x8x256xf32>
      %9 = vector.shape_cast %6 : vector<8x1xf32> to vector<1x8x1xf32>
      %10 = vector.broadcast %9 : vector<1x8x1xf32> to vector<2x8x256xf32>
      %11 = arith.mulf %8, %10 : vector<2x8x256xf32>
      %12 = vector.shape_cast %7 : vector<8x1xf32> to vector<1x8x1xf32>
      %13 = vector.broadcast %12 : vector<1x8x1xf32> to vector<2x8x256xf32>
      %14 = arith.addf %11, %13 : vector<2x8x256xf32>
      %cst = arith.constant 0.000000e+00 : f32
      %15 = vector.broadcast %cst : f32 to vector<2x8x256xf32>
      %16 = arith.maximumf %14, %15 : vector<2x8x256xf32>
      %c0_7 = arith.constant 0 : index
      %c0_8 = arith.constant 0 : index
      %c0_9 = arith.constant 0 : index
      %17 = vector.load %arg6[%c0_7, %c0_8, %c0_9] : memref<2x8x256xf32, #tpu.memory_space<vmem>>, vector<2x8x256xf32>
      tpu.vector_store %arg6[%c0_7, %c0_8, %c0_9], %16 {strides = array<i32>} : memref<2x8x256xf32, #tpu.memory_space<vmem>>, vector<2x8x256xf32>,
    } else {
    }
    return
  }
  func.func @transform_0(%arg0: i32, %arg1: i32, %arg2: i32) -> (i32, i32, i32) {
    %c1_i32 = arith.constant 1 : i32
    %0 = arith.subi %c1_i32, %arg0 : i32
    %1 = arith.muli %arg1, %0 : i32
    %c0_i32 = arith.constant 0 : i32
    %2 = arith.muli %c0_i32, %arg0 : i32
    %3 = arith.addi %1, %2 : i32
    %c1_i32_0 = arith.constant 1 : i32
    %4 = arith.subi %c1_i32_0, %arg0 : i32
    %5 = arith.muli %arg2, %4 : i32
    %c0_i32_1 = arith.constant 0 : i32
    %6 = arith.muli %c0_i32_1, %arg0 : i32
    %7 = arith.addi %5, %6 : i32
    %c0_i32_2 = arith.constant 0 : i32
    %c0_i32_3 = arith.constant 0 : i32
    return %3, %c0_i32_2, %7 : i32, i32, i32
  }
  func.func @transform_1(%arg0: i32, %arg1: i32, %arg2: i32) -> (i32, i32) {
    %c0_i32 = arith.constant 0 : i32
    %c0_i32_0 = arith.constant 0 : i32
    %c0_i32_1 = arith.constant 0 : i32
    return %c0_i32, %c0_i32_0 : i32, i32
  }
  func.func @transform_2(%arg0: i32, %arg1: i32, %arg2: i32) -> (i32, i32) {
    %c0_i32 = arith.constant 0 : i32
    %c0_i32_0 = arith.constant 0 : i32
    %c0_i32_1 = arith.constant 0 : i32
    return %c0_i32, %c0_i32_0 : i32, i32
  }
  func.func @transform_3(%arg0: i32, %arg1: i32, %arg2: i32) -> (i32, i32, i32) {
    %0 = arith.muli %arg1, %arg0 : i32
    %1 = arith.muli %arg2, %arg0 : i32
    %c0_i32 = arith.constant 0 : i32
    %c0_i32_0 = arith.constant 0 : i32
    return %0, %c0_i32, %1 : i32, i32, i32
  }
  func.func @transform_4(%arg0: i32, %arg1: i32, %arg2: i32) -> (i32, i32) {
    %c0_i32 = arith.constant 0 : i32
    %c0_i32_0 = arith.constant 0 : i32
    %c0_i32_1 = arith.constant 0 : i32
    return %c0_i32, %c0_i32_0 : i32, i32
  }
}

</mosaic_0001>

<llo_original>
// kernel: tpu_custom_call.1
$region0: #{tpu_custom_call.1}
  #allocation0 [shape = 'u32[]', space=smem, size = 0x4, offset = 0x4, fixed_abs, tag = 'smem constant byte address 0x4 - core index']
  #allocation1 [shape = 'u32[144,128]{1,0:T(1,128)}', space=vmem, size = 0x12000, scoped, tag = 'internal scratch']
  #allocation2 [shape = 'f32[8,128]{1,0:T(8,128)}', space=vmem, size = 0x1000, scoped, tag = 'scratch operand']
  #allocation3 [shape = 'f32[8,128]{1,0:T(8,128)}', space=vmem, size = 0x1000, scoped, tag = 'scratch operand']
  #allocation4 [shape = 'f32[8,2]{1,0:T(8,128)}', space=vmem, size = 0x1000, scoped, tag = 'scratch operand']
  #allocation5 [shape = 'f32[2,8,256]{2,1,0:T(8,128)}', space=vmem, size = 0x4000, scoped, tag = 'scratch operand']
  %s0 = inlined_call_operand.vmem [shape: f32[2,4,256], index: 0, kind: input, shape index: {}]
  %s1 = inlined_call_operand.vmem [shape: f32[8,4], index: 1, kind: input, shape index: {}]
  %s2 = inlined_call_operand.vmem [shape: f32[8,4], index: 2, kind: input, shape index: {}]
  %s3 = inlined_call_operand.hbm [shape: f32[2,8,256], index: 3, kind: output, shape index: {0}]
  %s4 = inlined_call_operand.vmem [shape: f32[8,2], index: 4, kind: output, shape index: {1}]
  %5 = xla_tuple %s3, %s4
  %s6 = sld [smem:[#allocation0]]
  $region69: #{tpu_custom_call.1} parent=0
    _
  %s8 = ssub.s32 1, %s6
  %s9 = scalar_select 0, %s8, %s6
  $region1: #{tpu_custom_call.1} parent=0
    #allocation6 [shape = 'u8[32768]{0}', space=vmem, size = 0x8000, scoped, tag = 'output window, operand 0']
    #allocation7 [shape = 's32[2]{0}', space=sflag, size = 0x8, scoped, tag = 'scoped memory for tpu_custom_call.1']
    %10 = vsyncpa [#allocation7], 0
    %s11 = scalar_lea.sflag [#allocation7], 1
    %12 = vsyncpa %s11, 0
    loop: start=0, step=1, limit=4
    $region2: #{tpu_custom_call.1} parent=1 // loop_pre_header
      _
    $region3: #{tpu_custom_call.1} parent=1 // loop_header
      %s14 = sphi 0, %s18
      %p15 = scmp.ge.s32.totalorder %s14, 4
      %s21 = sphi 0, %s40
      %s22 = sphi 0, %s36
      %s23 = sphi 0, %s32
      %s24 = sphi 0, %s21
      %s25 = sphi 0, %s22
      %s26 = sphi 0, %s23
      %s27 = sphi 0, %s24
      %s28 = sphi 0, %s25
      %s29 = sphi 0, %s26
      %s51 = sphi 0, %s53
      %s54 = sphi 0, %s51
      %s55 = sphi 0, %s54
      %s71 = sphi 0, %s55
      %s75 = sphi 0, %s75
      %s77 = sphi 0, %s75
      %s78 = sphi 0, %s77
      %s92 = sphi 0, %s78
      %s96 = sphi 0, %s96
      %s98 = sphi 0, %s96
      %s99 = sphi 0, %s98
      %s113 = sphi 0, %s99
      %s125 = sphi 0, %s127
      %s128 = sphi 0, %s125
      %s129 = sphi 0, %s128
      %s145 = sphi 0, %s129
      %s149 = sphi 0, %s149
      %s151 = sphi 0, %s149
      %s152 = sphi 0, %s151
      %s166 = sphi 0, %s152
    $region4: #{tpu_custom_call.1} parent=1 // loop_header_branch
      %17 = sbr.rel (%p15) target = $region8
    $region5: #{tpu_custom_call.1} parent=1 // loop_body
      %s19 = ssub.s32 %s14, 1
      %s20 = ssub.s32 %s14, 2
      %s30 = sadd.s32 1, %s23
      %p31 = scmp.ge.s32.totalorder %s30, 1
      %s32 = scalar_select %p31, 0, %s30
      %s33 = sadd.s32 1, %s22
      %s34 = scalar_select %p31, %s33, %s22
      %p35 = scmp.ge.s32.totalorder %s34, 1
      %s36 = scalar_select %p35, 0, %s34
      %s37 = sadd.s32 1, %s21
      %s38 = scalar_select %p35, %s37, %s21
      %p39 = scmp.ge.s32.totalorder %s38, 2
      %s40 = scalar_select %p39, 0, %s38
      %s41 = ssub.s32 1, %s21
      %s42 = smul.u32 %s22, %s41
      %s43 = smul.u32 %s23, %s41
      %s44 = ssub.s32 1, %s40
      %s45 = smul.u32 %s36, %s44
      %s46 = smul.u32 %s32, %s44
      %s47 = ssub.s32 %s42, %s45
      %s48 = ssub.s32 %s43, %s46
      %s49 = sor.u32 %s47, %s48
      %p50 = scmp.eq.s32.totalorder %s49, 0
      %s52 = sadd.s32 %s51, 1
      %s53 = scalar_select %p50, %s51, %s52
      %p56 = pneg %p50
      %p57 = scmp.eq.s32.totalorder %s14, 1
      %p58 = por %p56, %p57
      %p59 = scmp.ne.s32.totalorder %s51, %s54
      %p60 = scmp.eq.s32.totalorder %s14, 0
      %p61 = por %p59, %p60
      %p62 = scmp.ne.s32.totalorder %s51, %s54
      %p63 = scmp.eq.s32.totalorder %s19, 1
      %p64 = por %p62, %p63
      %p65 = scmp.ne.s32.totalorder %s54, %s55
      %p66 = scmp.eq.s32.totalorder %s19, 0
      %p67 = por %p65, %p66
      %p68 = scmp.ne.s32.totalorder %s54, %s55
      %p69 = scmp.eq.s32.totalorder %s20, 1
      %p70 = por %p68, %p69
      %p72 = scmp.ne.s32.totalorder %s55, %s71
      %p73 = scmp.eq.s32.totalorder %s20, 0
      %p74 = por %p72, %p73
      %s76 = sadd.s32 %s75, 1
      %p79 = scmp.eq.s32.totalorder %s14, 1
      %p80 = scmp.ne.s32.totalorder %s75, %s77
      %p81 = scmp.eq.s32.totalorder %s14, 0
      %p82 = por %p80, %p81
      %p83 = scmp.ne.s32.totalorder %s75, %s77
      %p84 = scmp.eq.s32.totalorder %s19, 1
      %p85 = por %p83, %p84
      %p86 = scmp.ne.s32.totalorder %s77, %s78
      %p87 = scmp.eq.s32.totalorder %s19, 0
      %p88 = por %p86, %p87
      %p89 = scmp.ne.s32.totalorder %s77, %s78
      %p90 = scmp.eq.s32.totalorder %s20, 1
      %p91 = por %p89, %p90
      %p93 = scmp.ne.s32.totalorder %s78, %s92
      %p94 = scmp.eq.s32.totalorder %s20, 0
      %p95 = por %p93, %p94
      %s97 = sadd.s32 %s96, 1
      %p100 = scmp.eq.s32.totalorder %s14, 1
      %p101 = scmp.ne.s32.totalorder %s96, %s98
      %p102 = scmp.eq.s32.totalorder %s14, 0
      %p103 = por %p101, %p102
      %p104 = scmp.ne.s32.totalorder %s96, %s98
      %p105 = scmp.eq.s32.totalorder %s19, 1
      %p106 = por %p104, %p105
      %p107 = scmp.ne.s32.totalorder %s98, %s99
      %p108 = scmp.eq.s32.totalorder %s19, 0
      %p109 = por %p107, %p108
      %p110 = scmp.ne.s32.totalorder %s98, %s99
      %p111 = scmp.eq.s32.totalorder %s20, 1
      %p112 = por %p110, %p111
      %p114 = scmp.ne.s32.totalorder %s99, %s113
      %p115 = scmp.eq.s32.totalorder %s20, 0
      %p116 = por %p114, %p115
      %s117 = smul.u32 %s22, %s21
      %s118 = smul.u32 %s23, %s21
      %s119 = smul.u32 %s36, %s40
      %s120 = smul.u32 %s32, %s40
      %s121 = ssub.s32 %s117, %s119
      %s122 = ssub.s32 %s118, %s120
      %s123 = sor.u32 %s121, %s122
      %p124 = scmp.eq.s32.totalorder %s123, 0
      %s126 = sadd.s32 %s125, 1
      %s127 = scalar_select %p124, %s125, %s126
      %p130 = pneg %p124
      %p131 = scmp.eq.s32.totalorder %s14, 1
      %p132 = por %p130, %p131
      %p133 = scmp.ne.s32.totalorder %s125, %s128
      %p134 = scmp.eq.s32.totalorder %s14, 0
      %p135 = por %p133, %p134
      %p136 = scmp.ne.s32.totalorder %s125, %s128
      %p137 = scmp.eq.s32.totalorder %s19, 1
      %p138 = por %p136, %p137
      %p139 = scmp.ne.s32.totalorder %s128, %s129
      %p140 = scmp.eq.s32.totalorder %s19, 0
      %p141 = por %p139, %p140
      %p142 = scmp.ne.s32.totalorder %s128, %s129
      %p143 = scmp.eq.s32.totalorder %s20, 1
      %p144 = por %p142, %p143
      %p146 = scmp.ne.s32.totalorder %s129, %s145
      %p147 = scmp.eq.s32.totalorder %s20, 0
      %p148 = por %p146, %p147
      %s150 = sadd.s32 %s149, 1
      %p153 = scmp.eq.s32.totalorder %s14, 1
      %p154 = scmp.ne.s32.totalorder %s149, %s151
      %p155 = scmp.eq.s32.totalorder %s14, 0
      %p156 = por %p154, %p155
      %p157 = scmp.ne.s32.totalorder %s149, %s151
      %p158 = scmp.eq.s32.totalorder %s19, 1
      %p159 = por %p157, %p158
      %p160 = scmp.ne.s32.totalorder %s151, %s152
      %p161 = scmp.eq.s32.totalorder %s19, 0
      %p162 = por %p160, %p161
      %p163 = scmp.ne.s32.totalorder %s151, %s152
      %p164 = scmp.eq.s32.totalorder %s20, 1
      %p165 = por %p163, %p164
      %p167 = scmp.ne.s32.totalorder %s152, %s166
      %p168 = scmp.eq.s32.totalorder %s20, 0
      %p169 = por %p167, %p168
      %p170 = scmp.le.s32.totalorder 1, %s14
      %p171 = scmp.lt.s32.totalorder %s14, 3
      %p172 = pnand %p170, %p171
      %p173 = pneg %p172
      // Predicated region
      $region9: #{tpu_custom_call.1} parent=5 // pred_check
        _
      $region10: #{tpu_custom_call.1} parent=5 // pred_check_branch
        %175 = sbr.rel (%p172) target = $region12
      $region11: #{tpu_custom_call.1} parent=5 // pred_region
        %s176 = ssub.s32 %s14, 1
        // Predicated region
        $region13: #{tpu_custom_call.1} parent=11 // pred_check
          %p177 = pneg %p88
        $region14: #{tpu_custom_call.1} parent=11 // pred_check_branch
          %179 = sbr.rel (%p177) target = $region16
        $region15: #{tpu_custom_call.1} parent=11 // pred_region
          _
        $region16: #{tpu_custom_call.1} parent=11 // pred_fallthru
          _
        // Predicated region
        $region17: #{tpu_custom_call.1} parent=11 // pred_check
          %p180 = pneg %p109
        $region18: #{tpu_custom_call.1} parent=11 // pred_check_branch
          %182 = sbr.rel (%p180) target = $region20
        $region19: #{tpu_custom_call.1} parent=11 // pred_region
          _
        $region20: #{tpu_custom_call.1} parent=11 // pred_fallthru
          _
      $region12: #{tpu_custom_call.1} parent=5 // pred_fallthru
        _
      %p183 = scmp.lt.s32.totalorder %s14, 2
      // Predicated region
      $region21: #{tpu_custom_call.1} parent=5 // pred_check
        %p184 = pneg %p183
      $region22: #{tpu_custom_call.1} parent=5 // pred_check_branch
        %186 = sbr.rel (%p184) target = $region24
      $region23: #{tpu_custom_call.1} parent=5 // pred_region
        // Predicated region
        $region25: #{tpu_custom_call.1} parent=23 // pred_check
          %p187 = pneg %p61
        $region26: #{tpu_custom_call.1} parent=23 // pred_check_branch
          %189 = sbr.rel (%p187) target = $region28
        $region27: #{tpu_custom_call.1} parent=23 // pred_region
          %s190 = ssub.s32 1, %s21
          %s191 = smul.u32 %s22, %s190
          %s192 = smul.u32 %s23, %s190
          %s193 = smul.u32 2, %s191
          %s194 = smul.u32 2, %s192
          %p195 = scmp.lt.s32.totalorder %s193, 1
          %s196 = scalar_select %p195, %s193, 1
          %p197 = scmp.lt.s32.totalorder %s194, 1
          %s198 = scalar_select %p197, %s194, 1
          %s199 = smul.addr %s196, 2
          %s200 = sadd.s32 %s198, %s199
          %s201 = smul.addr %s200, 4
          %s202 = scalar_lea.vmem %s0, %s201
          %s203 = ssub.s32 1, %s21
          %s204 = smul.u32 %s22, %s203
          %s205 = smul.u32 %s23, %s203
          %s206 = smul.u32 2, %s204
          %s207 = smul.u32 2, %s205
        $region28: #{tpu_custom_call.1} parent=23 // pred_fallthru
          _
      $region24: #{tpu_custom_call.1} parent=5 // pred_fallthru
        _
      %p208 = scmp.le.s32.totalorder 1, %s14
      %p209 = scmp.lt.s32.totalorder %s14, 3
      %p210 = pnand %p208, %p209
      %p211 = pneg %p210
      // Predicated region
      $region29: #{tpu_custom_call.1} parent=5 // pred_check
        _
      $region30: #{tpu_custom_call.1} parent=5 // pred_check_branch
        %213 = sbr.rel (%p210) target = $region32
      $region31: #{tpu_custom_call.1} parent=5 // pred_region
        %s214 = ssub.s32 %s14, 1
        %s215 = ssub.s32 1, %s24
        %s216 = smul.u32 %s25, %s215
        %s217 = smul.u32 %s26, %s215
        %s218 = smul.u32 2, %s216
        %s219 = smul.u32 2, %s217
        %p220 = scmp.lt.s32.totalorder %s218, 1
        %s221 = scalar_select %p220, %s218, 1
        %p222 = scmp.lt.s32.totalorder %s219, 1
        %s223 = scalar_select %p222, %s219, 1
        %s224 = smul.addr %s221, 2
        %s225 = sadd.s32 %s223, %s224
        %s226 = smul.addr %s225, 4
        %s227 = scalar_lea.vmem %s0, %s226
        %p228 = pneg %p67
        %p229 = pneg %p64
        %p230 = pneg %p88
        %p231 = pneg %p85
        %p232 = pneg %p109
        %p233 = pneg %p106
        %p234 = pneg %p141
        %p235 = pneg %p138
        %s236 = sand.u32 %s128, 1
        %s237 = scalar_lea.sflag [#allocation7], %s236
        %s238 = sand.u32 %s128, 1
        %s239 = smul.addr %s238, 32
        %s240 = scalar_lea.vmem [#allocation6], %s239
        %p241 = pneg %p162
        %p242 = pneg %p159
        %s243 = ssub.s32 1, %s24
        %s244 = smul.u32 %s25, %s243
        %s245 = smul.u32 %s26, %s243
        %s246 = smul.u32 2, %s244
        %s247 = smul.u32 2, %s245
        %p248 = scmp.lt.s32.totalorder %s246, 1
        %s249 = scalar_select %p248, %s246, 1
        %p250 = scmp.lt.s32.totalorder %s247, 1
        %s251 = scalar_select %p250, %s247, 1
        %s252 = smul.addr %s249, 2
        %s253 = sadd.s32 %s251, %s252
        %s254 = smul.addr %s253, 4
        %s255 = scalar_lea.vmem %s0, %s254
        %s256 = ssub.s32 1, %s24
        %s257 = smul.u32 %s25, %s256
        %s258 = smul.u32 %s26, %s256
        %s259 = smul.u32 2, %s257
        %s260 = smul.u32 2, %s258
        %s261 = smul.u32 %s25, %s24
        %s262 = smul.u32 %s26, %s24
        %s263 = smul.u32 2, %s261
        %s264 = smul.u32 2, %s262
        %p265 = scmp.eq.s32.totalorder %s24, 0
        // Predicated region
        $region33: #{tpu_custom_call.1} parent=31 // pred_check
          %p266 = pneg %p265
        $region34: #{tpu_custom_call.1} parent=31 // pred_check_branch
          %268 = sbr.rel (%p266) target = $region36
        $region35: #{tpu_custom_call.1} parent=31 // pred_region
          %p269 = scmp.eq.s32.totalorder %s25, 0
          %p270 = scmp.eq.s32.totalorder %s26, 0
          %p271 = pnand %p269, %p270
          %p272 = pneg %p271
          // Predicated region
          $region37: #{tpu_custom_call.1} parent=35 // pred_check
            _
          $region38: #{tpu_custom_call.1} parent=35 // pred_check_branch
            %274 = sbr.rel (%p271) target = $region40
          $region39: #{tpu_custom_call.1} parent=35 // pred_region
            %275 = vst [vmem:[#allocation2] sm:$0xff] 0.0
            %276 = vst [vmem:[#allocation3] sm:$0xff] 0.0
          $region40: #{tpu_custom_call.1} parent=35 // pred_fallthru
            _
          %v277 = vld [vmem:[%s1] sm:$0xff]
          %v278 = vld [vmem:[%s255] sm:$0xff]
          %v279 = vld [vmem:[%s255 + $0x8] sm:$0xff]
          %281 = vset.pattern.permute.xlu0 0
          %282 = vperm.xlu0 %281, %v277
          %v283 = vpop.permute.xlu0 %282
          %v287 = vlaneseq
          %v288 = vshrl.u32 %v287, 7
          %v289 = vsub.s32 0, %v288
          %v290 = vrot.slane %v278, %v289
          %v291 = vlaneseq
          %v292 = vshrl.u32 %v291, 7
          %v293 = vsub.s32 4, %v292
          %v294 = vrot.slane %v278, %v293
          %v295 = vlaneseq
          %v296 = vshrl.u32 %v295, 7
          %v297 = vsub.s32 0, %v296
          %v298 = vrot.slane %v279, %v297
          %v299 = vlaneseq
          %v300 = vshrl.u32 %v299, 7
          %v301 = vsub.s32 4, %v300
          %v302 = vrot.slane %v279, %v301
          %v307 = vlaneseq
          %v308 = vshrl.u32 %v307, 7
          %v309 = vsub.s32 0, %v308
          %v310 = vrot.slane %v290, %v309
          %v311 = vlaneseq
          %v312 = vshrl.u32 %v311, 7
          %v313 = vsub.s32 0, %v312
          %v314 = vrot.slane %v294, %v313
          %v315 = vlaneseq
          %v316 = vshrl.u32 %v315, 7
          %v317 = vsub.s32 0, %v316
          %v318 = vrot.slane %v298, %v317
          %v319 = vlaneseq
          %v320 = vshrl.u32 %v319, 7
          %v321 = vsub.s32 0, %v320
          %v322 = vrot.slane %v302, %v321
          %v323 = vmul.f32 %v283, %v310
          %v324 = vmul.f32 %v283, %v314
          %v325 = vmul.f32 %v283, %v318
          %v326 = vmul.f32 %v283, %v322
          %327 = vset.pattern.permute.xlu0 1
          %328 = vperm.xlu0 %327, %v277
          %v329 = vpop.permute.xlu0 %328
          %v331 = vlaneseq
          %v332 = vshrl.u32 %v331, 7
          %v333 = vsub.s32 1, %v332
          %v334 = vrot.slane %v278, %v333
          %v335 = vlaneseq
          %v336 = vshrl.u32 %v335, 7
          %v337 = vsub.s32 5, %v336
          %v338 = vrot.slane %v278, %v337
          %v339 = vlaneseq
          %v340 = vshrl.u32 %v339, 7
          %v341 = vsub.s32 1, %v340
          %v342 = vrot.slane %v279, %v341
          %v343 = vlaneseq
          %v344 = vshrl.u32 %v343, 7
          %v345 = vsub.s32 5, %v344
          %v346 = vrot.slane %v279, %v345
          %v351 = vlaneseq
          %v352 = vshrl.u32 %v351, 7
          %v353 = vsub.s32 1, %v352
          %v354 = vrot.slane %v334, %v353
          %v355 = vlaneseq
          %v356 = vshrl.u32 %v355, 7
          %v357 = vsub.s32 1, %v356
          %v358 = vrot.slane %v338, %v357
          %v359 = vlaneseq
          %v360 = vshrl.u32 %v359, 7
          %v361 = vsub.s32 1, %v360
          %v362 = vrot.slane %v342, %v361
          %v363 = vlaneseq
          %v364 = vshrl.u32 %v363, 7
          %v365 = vsub.s32 1, %v364
          %v366 = vrot.slane %v346, %v365
          %v367 = vmul.f32 %v329, %v354
          %v368 = vmul.f32 %v329, %v358
          %v369 = vmul.f32 %v329, %v362
          %v370 = vmul.f32 %v329, %v366
          %v371 = vadd.f32 %v323, %v367
          %v372 = vadd.f32 %v324, %v368
          %v373 = vadd.f32 %v325, %v369
          %v374 = vadd.f32 %v326, %v370
          %375 = vset.pattern.permute.xlu0 2
          %376 = vperm.xlu0 %375, %v277
          %v377 = vpop.permute.xlu0 %376
          %v379 = vlaneseq
          %v380 = vshrl.u32 %v379, 7
          %v381 = vsub.s32 2, %v380
          %v382 = vrot.slane %v278, %v381
          %v383 = vlaneseq
          %v384 = vshrl.u32 %v383, 7
          %v385 = vsub.s32 6, %v384
          %v386 = vrot.slane %v278, %v385
          %v387 = vlaneseq
          %v388 = vshrl.u32 %v387, 7
          %v389 = vsub.s32 2, %v388
          %v390 = vrot.slane %v279, %v389
          %v391 = vlaneseq
          %v392 = vshrl.u32 %v391, 7
          %v393 = vsub.s32 6, %v392
          %v394 = vrot.slane %v279, %v393
          %v399 = vlaneseq
          %v400 = vshrl.u32 %v399, 7
          %v401 = vsub.s32 2, %v400
          %v402 = vrot.slane %v382, %v401
          %v403 = vlaneseq
          %v404 = vshrl.u32 %v403, 7
          %v405 = vsub.s32 2, %v404
          %v406 = vrot.slane %v386, %v405
          %v407 = vlaneseq
          %v408 = vshrl.u32 %v407, 7
          %v409 = vsub.s32 2, %v408
          %v410 = vrot.slane %v390, %v409
          %v411 = vlaneseq
          %v412 = vshrl.u32 %v411, 7
          %v413 = vsub.s32 2, %v412
          %v414 = vrot.slane %v394, %v413
          %v415 = vmul.f32 %v377, %v402
          %v416 = vmul.f32 %v377, %v406
          %v417 = vmul.f32 %v377, %v410
          %v418 = vmul.f32 %v377, %v414
          %v419 = vadd.f32 %v371, %v415
          %v420 = vadd.f32 %v372, %v416
          %v421 = vadd.f32 %v373, %v417
          %v422 = vadd.f32 %v374, %v418
          %423 = vset.pattern.permute.xlu0 3
          %424 = vperm.xlu0 %423, %v277
          %v425 = vpop.permute.xlu0 %424
          %v427 = vlaneseq
          %v428 = vshrl.u32 %v427, 7
          %v429 = vsub.s32 3, %v428
          %v430 = vrot.slane %v278, %v429
          %v431 = vlaneseq
          %v432 = vshrl.u32 %v431, 7
          %v433 = vsub.s32 7, %v432
          %v434 = vrot.slane %v278, %v433
          %v435 = vlaneseq
          %v436 = vshrl.u32 %v435, 7
          %v437 = vsub.s32 3, %v436
          %v438 = vrot.slane %v279, %v437
          %v439 = vlaneseq
          %v440 = vshrl.u32 %v439, 7
          %v441 = vsub.s32 7, %v440
          %v442 = vrot.slane %v279, %v441
          %v447 = vlaneseq
          %v448 = vshrl.u32 %v447, 7
          %v449 = vsub.s32 3, %v448
          %v450 = vrot.slane %v430, %v449
          %v451 = vlaneseq
          %v452 = vshrl.u32 %v451, 7
          %v453 = vsub.s32 3, %v452
          %v454 = vrot.slane %v434, %v453
          %v455 = vlaneseq
          %v456 = vshrl.u32 %v455, 7
          %v457 = vsub.s32 3, %v456
          %v458 = vrot.slane %v438, %v457
          %v459 = vlaneseq
          %v460 = vshrl.u32 %v459, 7
          %v461 = vsub.s32 3, %v460
          %v462 = vrot.slane %v442, %v461
          %v463 = vmul.f32 %v425, %v450
          %v464 = vmul.f32 %v425, %v454
          %v465 = vmul.f32 %v425, %v458
          %v466 = vmul.f32 %v425, %v462
          %v467 = vadd.f32 %v419, %v463
          %v468 = vadd.f32 %v420, %v464
          %v469 = vadd.f32 %v421, %v465
          %v470 = vadd.f32 %v422, %v466
          %v471 = vadd.f32 %v467, %v469
          %v472 = vadd.f32 %v468, %v470
          %v473 = vmul.f32 %v467, %v467
          %v474 = vmul.f32 %v468, %v468
          %v475 = vmul.f32 %v469, %v469
          %v476 = vmul.f32 %v470, %v470
          %v477 = vadd.f32 %v473, %v475
          %v478 = vadd.f32 %v474, %v476
          %v479 = vld [vmem:[#allocation2] sm:$0xff]
          %v480 = vadd.f32 %v479, %v471
          %481 = vst [vmem:[#allocation2] sm:$0xff] %v480
          %v482 = vld [vmem:[#allocation3] sm:$0xff]
          %v483 = vadd.f32 %v482, %v477
          %484 = vst [vmem:[#allocation3] sm:$0xff] %v483
          %v485 = vld [vmem:[#allocation2] sm:$0xff]
          %v486 = vadd.f32 %v485, %v472
          %487 = vst [vmem:[#allocation2] sm:$0xff] %v486
          %v488 = vld [vmem:[#allocation3] sm:$0xff]
          %v489 = vadd.f32 %v488, %v478
          %490 = vst [vmem:[#allocation3] sm:$0xff] %v489
          %491 = vst [vmem:[#allocation5] sm:$0xff] %v467
          %492 = vst [vmem:[#allocation5 + $0x8] sm:$0xff] %v468
          %493 = vst [vmem:[#allocation5 + $0x10] sm:$0xff] %v469
          %494 = vst [vmem:[#allocation5 + $0x18] sm:$0xff] %v470
          // Predicated region
          $region41: #{tpu_custom_call.1} parent=35 // pred_check
            _
          $region42: #{tpu_custom_call.1} parent=35 // pred_check_branch
            %496 = sbr.rel (%p271) target = $region44
          $region43: #{tpu_custom_call.1} parent=35 // pred_region
            %v497 = vld [vmem:[#allocation2] sm:$0xff]
            %498 = vadd.xlane.f32.xlu0 %v497
            %v499 = vpop.xlane.xlu0 %498
            %v500 = vld [vmem:[#allocation3] sm:$0xff]
            %501 = vadd.xlane.f32.xlu0 %v500
            %v502 = vpop.xlane.xlu0 %501
            %v503 = vmul.f32 %v499, 0.001953125
            %v504 = vmul.f32 %v502, 0.001953125
            %v505 = vmul.f32 %v503, %v503
            %v506 = vsub.f32 %v504, %v505
            %v507 = vmax.f32 %v506, 0.0
            %v508 = vadd.f32 %v507, 1e-05
            %v509 = vrsqrt.pop %v508
            %v510 = vld [vmem:[%s2] sm:$0xff]
            %v511 = vmul.f32 %v510, %v509
            %vm512 = vcmask 7168
            %513 = vst.msk [vmem:[#allocation4] sm:$0xff] %vm512, %v511
            %v514 = vmul.f32 %v503, %v511
            %516 = vrot.lane.b32.xlu0 %v514, 1
            %v517 = vpop.permute.xlu0 %516
            %v519 = vsub.f32 %v510, %v517
            %vm520 = vcmask 15368
            %521 = vst.msk [vmem:[#allocation4] sm:$0xff] %vm520, %v519
            %v522 = vmul.f32 %v507, 1.0019569
            %v523 = vmul.f32 %v510, 0.9
            %v524 = vmul.f32 %v503, 0.1
            %v525 = vadd.f32 %v523, %v524
            %527 = vrot.lane.b32.xlu0 %v525, 126
            %v528 = vpop.permute.xlu0 %527
            %530 = vst.msk [vmem:[%s4] sm:$0xff] %vm512, %v528
            %v531 = vmul.f32 %v522, 0.1
            %v532 = vadd.f32 %v523, %v531
            %534 = vrot.lane.b32.xlu0 %v532, 126
            %v535 = vpop.permute.xlu0 %534
            %537 = vst.msk [vmem:[%s4] sm:$0xff] %vm520, %v535
          $region44: #{tpu_custom_call.1} parent=35 // pred_fallthru
            _
        $region36: #{tpu_custom_call.1} parent=31 // pred_fallthru
          _
        %p538 = scmp.eq.s32.totalorder %s24, 1
        // Predicated region
        $region45: #{tpu_custom_call.1} parent=31 // pred_check
          %p539 = pneg %p538
        $region46: #{tpu_custom_call.1} parent=31 // pred_check_branch
          %541 = sbr.rel (%p539) target = $region48
        $region47: #{tpu_custom_call.1} parent=31 // pred_region
          %v542 = vld [vmem:[#allocation4] sm:$0xff]
          %v543 = vld [vmem:[#allocation5] sm:$0xff]
          %v544 = vld [vmem:[#allocation5 + $0x8] sm:$0xff]
          %v545 = vld [vmem:[#allocation5 + $0x10] sm:$0xff]
          %v546 = vld [vmem:[#allocation5 + $0x18] sm:$0xff]
          %548 = vset.pattern.permute.xlu0 0
          %549 = vperm.xlu0 %548, %v542
          %v550 = vpop.permute.xlu0 %549
          %v552 = vmul.f32 %v543, %v550
          %v553 = vmul.f32 %v544, %v550
          %v554 = vmul.f32 %v545, %v550
          %v555 = vmul.f32 %v546, %v550
          %556 = vset.pattern.permute.xlu0 1
          %557 = vperm.xlu0 %556, %v542
          %v558 = vpop.permute.xlu0 %557
          %v560 = vadd.f32 %v552, %v558
          %v561 = vadd.f32 %v553, %v558
          %v562 = vadd.f32 %v554, %v558
          %v563 = vadd.f32 %v555, %v558
          %v564 = vmax.f32 %v560, 0.0
          %v565 = vmax.f32 %v561, 0.0
          %v566 = vmax.f32 %v562, 0.0
          %v567 = vmax.f32 %v563, 0.0
          %568 = vst [vmem:[%s240] sm:$0xff] %v564
          %569 = vst [vmem:[%s240 + $0x8] sm:$0xff] %v565
          %570 = vst [vmem:[%s240 + $0x10] sm:$0xff] %v566
          %571 = vst [vmem:[%s240 + $0x18] sm:$0xff] %v567
        $region48: #{tpu_custom_call.1} parent=31 // pred_fallthru
          _
        %s572 = sand.u32 %s128, 1
        %s573 = scalar_lea.sflag [#allocation7], %s572
        %s574 = sand.u32 %s128, 1
        %s575 = smul.addr %s574, 32
        %s576 = scalar_lea.vmem [#allocation6], %s575
        // Predicated region
        $region49: #{tpu_custom_call.1} parent=31 // pred_check
          %p577 = pneg %p138
        $region50: #{tpu_custom_call.1} parent=31 // pred_check_branch
          %579 = sbr.rel (%p577) target = $region52
        $region51: #{tpu_custom_call.1} parent=31 // pred_region
          %s580 = smul.u32 %s25, %s24
          %s581 = smul.u32 %s26, %s24
          %s582 = smul.u32 2, %s580
          %s583 = smul.u32 2, %s581
          %s585 = ssub.s32 512, 512
          %586 = vsyncadd %s573, %s585
          %s587 = smul.addr %s582, 2
          %s588 = sadd.s32 %s583, %s587
          %s589 = smul.addr %s588, 128
          %s590 = scalar_lea.hbm %s3, %s589
          %s591 = sshll.u32 %s576, 4
          %s592 = int_to_ptr.vmem [resolvable:$true] %s591
          %597 = dma.vmem_to_hbm [thread:$0]  %s592, 512, %s590, %s573, 256, 256, 16
        $region52: #{tpu_custom_call.1} parent=31 // pred_fallthru
          _
        // Predicated region
        $region53: #{tpu_custom_call.1} parent=31 // pred_check
          %p598 = pneg %p159
        $region54: #{tpu_custom_call.1} parent=31 // pred_check_branch
          %600 = sbr.rel (%p598) target = $region56
        $region55: #{tpu_custom_call.1} parent=31 // pred_region
          _
        $region56: #{tpu_custom_call.1} parent=31 // pred_fallthru
          _
        // Predicated region
        $region57: #{tpu_custom_call.1} parent=31 // pred_check
          %p601 = pneg %p159
        $region58: #{tpu_custom_call.1} parent=31 // pred_check_branch
          %603 = sbr.rel (%p601) target = $region60
        $region59: #{tpu_custom_call.1} parent=31 // pred_region
          _
        $region60: #{tpu_custom_call.1} parent=31 // pred_fallthru
          _
      $region32: #{tpu_custom_call.1} parent=5 // pred_fallthru
        _
      %p604 = scmp.le.s32.totalorder 2, %s14
      // Predicated region
      $region61: #{tpu_custom_call.1} parent=5 // pred_check
        %p605 = pneg %p604
      $region62: #{tpu_custom_call.1} parent=5 // pred_check_branch
        %607 = sbr.rel (%p605) target = $region64
      $region63: #{tpu_custom_call.1} parent=5 // pred_region
        %s608 = ssub.s32 %s14, 2
        // Predicated region
        $region65: #{tpu_custom_call.1} parent=63 // pred_check
          %p609 = pneg %p144
        $region66: #{tpu_custom_call.1} parent=63 // pred_check_branch
          %611 = sbr.rel (%p609) target = $region68
        $region67: #{tpu_custom_call.1} parent=63 // pred_region
          %s612 = sand.u32 %s129, 1
          %s613 = scalar_lea.sflag [#allocation7], %s612
          %s614 = sand.u32 %s129, 1
          %s615 = smul.addr %s614, 32
          %s616 = scalar_lea.vmem [#allocation6], %s615
          %617 = dma.done %s613, 512
        $region68: #{tpu_custom_call.1} parent=63 // pred_fallthru
          _
      $region64: #{tpu_custom_call.1} parent=5 // pred_fallthru
        _
    $region6: #{tpu_custom_call.1} parent=1 // loop_footer
      %s18 = sadd.s32 1, %s14
    $region7: #{tpu_custom_call.1} parent=1 // loop_footer_branch
      %13 = sbr.rel target = $region3
    $region8: #{tpu_custom_call.1} parent=1 // loop_exit
      _
    %618 = vsyncpa [#allocation7], 1
    %s619 = scalar_lea.sflag [#allocation7], 1
    %620 = vsyncpa %s619, 1

</llo_original>
